<compile_context>
chip_gen: v6e
topology: v6e:2x2x1
jax: 0.10.0
libtpu: 0.0.40
codegen_flags: <defaults>
</compile_context>

<pallas_src>
import functools

import jax
import jax.numpy as jnp
from jax.experimental import pallas as pl
from jax.experimental.pallas import tpu as pltpu


def mem_decoder_attn_kernel(q_ref, k_ref, p_ref, o_ref, *, nhop, embedding_dim):
    E = embedding_dim

    # Load activations once.
    q = q_ref[...].astype(jnp.float32)          # (B, 2E)
    k = k_ref[...].astype(jnp.float32)          # (N, E)  (this is both K and V)

    # Static, 8-row-aligned slices of the packed parameter slab (single DMA).
    w_in = p_ref[0:2 * E, :]                    # (2E, E)  input projection (pre-T)
    wh_q = p_ref[2 * E:3 * E, :]                # (E, E)   hidden weight, Q_hop half
    wh_r = p_ref[3 * E:4 * E, :]                # (E, E)   hidden weight, R half
    b_in = p_ref[4 * E:4 * E + 1, :]            # (1, E)
    b_h = p_ref[4 * E + 8:4 * E + 9, :]         # (1, E)

    # input projection: Q_hop = Q @ W_in^T + b_in   (W_in pre-transposed)
    q_hop = jnp.dot(q, w_in, preferred_element_type=jnp.float32) + b_in

    # Transpose K ONCE, outside the hop loop: guarantees at most a single XLU
    # transpose per call even if dot_general would otherwise be canonicalized
    # into a per-hop transpose of the rhs.
    k_t = k.T                                   # (E, N)

    for _ in range(nhop):                       # nhop is small & static -> unrolled
        scores = jnp.dot(q_hop, k_t, preferred_element_type=jnp.float32)   # (B, N)
        # softmax over dim=1 (memory axis); reductions kept in f32
        m = jnp.max(scores, axis=1, keepdims=True)
        p = jnp.exp(scores - m)
        denom = jnp.sum(p, axis=1, keepdims=True)
        w = p * pl.reciprocal(denom, approx=True)                          # EUP, not VALU div
        # weighted sum of memory values (V == K)
        r = jnp.dot(w, k, preferred_element_type=jnp.float32)              # (B, E)
        # hidden layer on concat([Q_hop, R], 1), algebraically split into two
        # matmuls (E=32 is not lane-aligned, so a fused concat matmul would
        # need a non-lane-aligned scratch write).
        h = (jnp.dot(q_hop, wh_q, preferred_element_type=jnp.float32)
             + jnp.dot(r, wh_r, preferred_element_type=jnp.float32)
             + b_h)
        q_hop = jnp.tanh(h)

    o_ref[...] = q_hop.astype(o_ref.dtype)


def prepare_params(params, embedding_dim):
    """One-time parameter preprocessing (do NOT call per forward step).

    Pre-transposes the Linear weights, splits W_h into its Q_hop / R halves
    (algebraic concat split), pads each bias to an 8-row sublane-tile block,
    and packs everything into ONE (4E + 16, E) f32 slab so the kernel needs a
    single parameter DMA.

    Row layout:
      [0,       2E)      w_in^T
      [2E,      3E)      (W_h[:, :E])^T
      [3E,      4E)      (W_h[:, E:])^T
      [4E,      4E+8)    b_in in row 4E, rows 4E+1..4E+7 zero padding
      [4E+8,    4E+16)   b_h  in row 4E+8, rest zero padding
    """
    E = embedding_dim
    w_in = jnp.asarray(params["w_in"], jnp.float32)   # (E, 2E)
    w_h = jnp.asarray(params["w_h"], jnp.float32)     # (E, 2E)
    b_in = jnp.asarray(params["b_in"], jnp.float32)   # (E,)
    b_h = jnp.asarray(params["b_h"], jnp.float32)     # (E,)

    b_in_blk = jnp.zeros((8, E), jnp.float32).at[0].set(b_in)
    b_h_blk = jnp.zeros((8, E), jnp.float32).at[0].set(b_h)

    packed = jnp.concatenate(
        [w_in.T,            # (2E, E)
         w_h[:, :E].T,      # (E, E)
         w_h[:, E:].T,      # (E, E)
         b_in_blk,          # (8, E)
         b_h_blk],          # (8, E)
        axis=0)             # -> (4E + 16, E)
    return packed


@functools.partial(jax.jit, static_argnames=("embedding_dim", "nhop"))
def mem_decoder_attn(Q, K, V, packed_params, *, embedding_dim, nhop):
    """Q: (B, 2E), K: any shape whose flatten is (N*E,), V: unused (the
    original module overwrites V with K). `packed_params` comes from
    prepare_params() and is computed once, not per call."""
    del V  # reproduced from the reference: V = K.view(1, -1, E)
    E = embedding_dim
    B = Q.shape[0]
    Kmat = K.reshape(-1, E)                      # K.view(1, -1, E) -> (N, E)

    kernel = functools.partial(mem_decoder_attn_kernel,
                               nhop=nhop, embedding_dim=E)

    vmem = pl.BlockSpec(memory_space=pltpu.MemorySpace.VMEM)
    out = pl.pallas_call(
        kernel,
        out_shape=jax.ShapeDtypeStruct((B, E), jnp.float32),
        in_specs=[vmem, vmem, vmem],
        out_specs=vmem,
    )(Q, Kmat, packed_params)
    return out


def _reference(Q, K, V, params, *, embedding_dim, nhop):
    """Pure-JAX reference mirroring the PyTorch forward."""
    del V
    E = embedding_dim
    Kmat = K.reshape(-1, E)
    q_hop = Q @ params["w_in"].T + params["b_in"]
    for _ in range(nhop):
        scores = q_hop @ Kmat.T
        w = jax.nn.softmax(scores, axis=1)
        r = w @ Kmat
        concat = jnp.concatenate([q_hop, r], axis=1)
        q_hop = jnp.tanh(concat @ params["w_h"].T + params["b_h"])
    return q_hop


def init_params(key, embedding_dim):
    """Deterministic init mimicking torch.nn.Linear default (uniform +/- 1/sqrt(fan_in))."""
    E = embedding_dim
    k1, k2, k3, k4 = jax.random.split(key, 4)
    bound = 1.0 / jnp.sqrt(2.0 * E)
    return {
        "w_in": jax.random.uniform(k1, (E, 2 * E), jnp.float32, -bound, bound),
        "b_in": jax.random.uniform(k2, (E,), jnp.float32, -bound, bound),
        "w_h":  jax.random.uniform(k3, (E, 2 * E), jnp.float32, -bound, bound),
        "b_h":  jax.random.uniform(k4, (E,), jnp.float32, -bound, bound),
    }


if __name__ == "__main__":
    EMBED = 32      # embedding_dim E
    NHOP = 2
    B = 8           # batch (decoder steps) -- one f32 sublane tile
    N_MEM = 16      # number of memory slots

    key = jax.random.PRNGKey(0)
    kq, kk, kv, kp = jax.random.split(key, 4)
    Q = jax.random.normal(kq, (B, 2 * EMBED), jnp.float32)
    K = jax.random.normal(kk, (N_MEM, EMBED), jnp.float32)
    V = jax.random.normal(kv, (N_MEM, EMBED), jnp.float32)  # unused, like the original
    params = init_params(kp, EMBED)

    # One-time parameter preprocessing (transposes / packing happen here, not
    # in the per-token forward path).
    packed = prepare_params(params, EMBED)

    out = mem_decoder_attn(Q, K, V, packed, embedding_dim=EMBED, nhop=NHOP)
    out = jax.block_until_ready(out)

    ref = _reference(Q, K, V, params, embedding_dim=EMBED, nhop=NHOP)
    assert out.shape == (B, EMBED)
    assert jnp.allclose(out, ref, rtol=2e-3, atol=2e-3), "mismatch vs reference"

    print("KERNEL_OK")
</pallas_src>

<mosaic_0001>
module attributes {stable_mosaic.version = 11 : i64} {
  func.func @mem_decoder_attn_kernel(%arg0: memref<8x64xf32, #tpu.memory_space<vmem>>, %arg1: memref<16x32xf32, #tpu.memory_space<vmem>>, %arg2: memref<144x32xf32, #tpu.memory_space<vmem>>, %arg3: memref<8x32xf32, #tpu.memory_space<vmem>>) attributes {dimension_semantics = [], scalar_prefetch = 0 : i64, scratch_operands = 0 : i64, tpu.core_type = #tpu.core_type<tc>} {
    %c0 = arith.constant 0 : index
    %c0_0 = arith.constant 0 : index
    %0 = vector.load %arg0[%c0, %c0_0] : memref<8x64xf32, #tpu.memory_space<vmem>>, vector<8x64xf32>
    %c0_1 = arith.constant 0 : index
    %c0_2 = arith.constant 0 : index
    %1 = vector.load %arg1[%c0_1, %c0_2] : memref<16x32xf32, #tpu.memory_space<vmem>>, vector<16x32xf32>
    %c0_3 = arith.constant 0 : index
    %c0_4 = arith.constant 0 : index
    %2 = vector.load %arg2[%c0_3, %c0_4] : memref<144x32xf32, #tpu.memory_space<vmem>>, vector<64x32xf32>
    %c64 = arith.constant 64 : index
    %c0_5 = arith.constant 0 : index
    %3 = vector.load %arg2[%c64, %c0_5] : memref<144x32xf32, #tpu.memory_space<vmem>>, vector<32x32xf32>
    %c96 = arith.constant 96 : index
    %c0_6 = arith.constant 0 : index
    %4 = vector.load %arg2[%c96, %c0_6] : memref<144x32xf32, #tpu.memory_space<vmem>>, vector<32x32xf32>
    %c128 = arith.constant 128 : index
    %c0_7 = arith.constant 0 : index
    %5 = vector.load %arg2[%c128, %c0_7] : memref<144x32xf32, #tpu.memory_space<vmem>>, vector<1x32xf32>
    %c136 = arith.constant 136 : index
    %c0_8 = arith.constant 0 : index
    %6 = vector.load %arg2[%c136, %c0_8] : memref<144x32xf32, #tpu.memory_space<vmem>>, vector<1x32xf32>
    %cst = arith.constant dense<0.000000e+00> : vector<8x32xf32>
    %7 = tpu.matmul %0, %2, %cst {dimension_numbers = #tpu.dot_dimension_numbers<[1], [0], [0], [1], [0, 0, 1, 1], [], []>} : vector<8x64xf32>, vector<64x32xf32>, vector<8x32xf32> -> vector<8x32xf32>
    %8 = vector.broadcast %5 : vector<1x32xf32> to vector<8x32xf32>
    %9 = arith.addf %7, %8 : vector<8x32xf32>
    %10 = tpu.transpose %1, [1, 0] : vector<16x32xf32> -> vector<32x16xf32>
    %cst_9 = arith.constant dense<0.000000e+00> : vector<8x16xf32>
    %11 = tpu.matmul %9, %10, %cst_9 {dimension_numbers = #tpu.dot_dimension_numbers<[1], [0], [0], [1], [0, 0, 1, 1], [], []>} : vector<8x32xf32>, vector<32x16xf32>, vector<8x16xf32> -> vector<8x16xf32>
    %cst_10 = arith.constant dense<0xFF800000> : vector<8xf32>
    %12 = vector.multi_reduction <maximumf>, %11, %cst_10 [1] : vector<8x16xf32> to vector<8xf32>
    %13 = vector.shape_cast %12 : vector<8xf32> to vector<8x1xf32>
    %14 = vector.broadcast %13 : vector<8x1xf32> to vector<8x16xf32>
    %15 = arith.subf %11, %14 : vector<8x16xf32>
    %16 = math.exp %15 : vector<8x16xf32>
    %cst_11 = arith.constant dense<0.000000e+00> : vector<8xf32>
    %17 = vector.multi_reduction <add>, %16, %cst_11 [1] : vector<8x16xf32> to vector<8xf32>
    %18 = vector.shape_cast %17 : vector<8xf32> to vector<8x1xf32>
    %19 = tpu.reciprocal %18 {approx = true} : vector<8x1xf32> -> vector<8x1xf32>
    %20 = vector.broadcast %19 : vector<8x1xf32> to vector<8x16xf32>
    %21 = arith.mulf %16, %20 : vector<8x16xf32>
    %cst_12 = arith.constant dense<0.000000e+00> : vector<8x32xf32>
    %22 = tpu.matmul %21, %1, %cst_12 {dimension_numbers = #tpu.dot_dimension_numbers<[1], [0], [0], [1], [0, 0, 1, 1], [], []>} : vector<8x16xf32>, vector<16x32xf32>, vector<8x32xf32> -> vector<8x32xf32>
    %cst_13 = arith.constant dense<0.000000e+00> : vector<8x32xf32>
    %23 = tpu.matmul %9, %3, %cst_13 {dimension_numbers = #tpu.dot_dimension_numbers<[1], [0], [0], [1], [0, 0, 1, 1], [], []>} : vector<8x32xf32>, vector<32x32xf32>, vector<8x32xf32> -> vector<8x32xf32>
    %cst_14 = arith.constant dense<0.000000e+00> : vector<8x32xf32>
    %24 = tpu.matmul %22, %4, %cst_14 {dimension_numbers = #tpu.dot_dimension_numbers<[1], [0], [0], [1], [0, 0, 1, 1], [], []>} : vector<8x32xf32>, vector<32x32xf32>, vector<8x32xf32> -> vector<8x32xf32>
    %25 = arith.addf %23, %24 : vector<8x32xf32>
    %26 = vector.broadcast %6 : vector<1x32xf32> to vector<8x32xf32>
    %27 = arith.addf %25, %26 : vector<8x32xf32>
    %28 = math.tanh %27 : vector<8x32xf32>
    %cst_15 = arith.constant dense<0.000000e+00> : vector<8x16xf32>
    %29 = tpu.matmul %28, %10, %cst_15 {dimension_numbers = #tpu.dot_dimension_numbers<[1], [0], [0], [1], [0, 0, 1, 1], [], []>} : vector<8x32xf32>, vector<32x16xf32>, vector<8x16xf32> -> vector<8x16xf32>
    %cst_16 = arith.constant dense<0xFF800000> : vector<8xf32>
    %30 = vector.multi_reduction <maximumf>, %29, %cst_16 [1] : vector<8x16xf32> to vector<8xf32>
    %31 = vector.shape_cast %30 : vector<8xf32> to vector<8x1xf32>
    %32 = vector.broadcast %31 : vector<8x1xf32> to vector<8x16xf32>
    %33 = arith.subf %29, %32 : vector<8x16xf32>
    %34 = math.exp %33 : vector<8x16xf32>
    %cst_17 = arith.constant dense<0.000000e+00> : vector<8xf32>
    %35 = vector.multi_reduction <add>, %34, %cst_17 [1] : vector<8x16xf32> to vector<8xf32>
    %36 = vector.shape_cast %35 : vector<8xf32> to vector<8x1xf32>
    %37 = tpu.reciprocal %36 {approx = true} : vector<8x1xf32> -> vector<8x1xf32>
    %38 = vector.broadcast %37 : vector<8x1xf32> to vector<8x16xf32>
    %39 = arith.mulf %34, %38 : vector<8x16xf32>
    %cst_18 = arith.constant dense<0.000000e+00> : vector<8x32xf32>
    %40 = tpu.matmul %39, %1, %cst_18 {dimension_numbers = #tpu.dot_dimension_numbers<[1], [0], [0], [1], [0, 0, 1, 1], [], []>} : vector<8x16xf32>, vector<16x32xf32>, vector<8x32xf32> -> vector<8x32xf32>
    %cst_19 = arith.constant dense<0.000000e+00> : vector<8x32xf32>
    %41 = tpu.matmul %28, %3, %cst_19 {dimension_numbers = #tpu.dot_dimension_numbers<[1], [0], [0], [1], [0, 0, 1, 1], [], []>} : vector<8x32xf32>, vector<32x32xf32>, vector<8x32xf32> -> vector<8x32xf32>
    %cst_20 = arith.constant dense<0.000000e+00> : vector<8x32xf32>
    %42 = tpu.matmul %40, %4, %cst_20 {dimension_numbers = #tpu.dot_dimension_numbers<[1], [0], [0], [1], [0, 0, 1, 1], [], []>} : vector<8x32xf32>, vector<32x32xf32>, vector<8x32xf32> -> vector<8x32xf32>
    %43 = arith.addf %41, %42 : vector<8x32xf32>
    %44 = vector.broadcast %6 : vector<1x32xf32> to vector<8x32xf32>
    %45 = arith.addf %43, %44 : vector<8x32xf32>
    %46 = math.tanh %45 : vector<8x32xf32>
    %c0_21 = arith.constant 0 : index
    %c0_22 = arith.constant 0 : index
    %47 = vector.load %arg3[%c0_21, %c0_22] : memref<8x32xf32, #tpu.memory_space<vmem>>, vector<8x32xf32>
    tpu.vector_store %arg3[%c0_21, %c0_22], %46 {strides = array<i32>} : memref<8x32xf32, #tpu.memory_space<vmem>>, vector<8x32xf32>,
    return
  }
}

</mosaic_0001>

<llo_original>
// kernel: mem_decoder_attn.1
$region0: #{mem_decoder_attn.1}
  #allocation0 [shape = 'u32[]', space=smem, size = 0x4, offset = 0x4, fixed_abs, tag = 'smem constant byte address 0x4 - core index']
  #allocation1 [shape = 'u32[144,128]{1,0:T(1,128)}', space=vmem, size = 0x12000, scoped, tag = 'internal scratch']
  %s0 = inlined_call_operand.vmem [shape: f32[8,64], index: 0, kind: input, shape index: {}]
  %s1 = inlined_call_operand.vmem [shape: f32[16,32], index: 1, kind: input, shape index: {}]
  %s2 = inlined_call_operand.vmem [shape: f32[144,32], index: 2, kind: input, shape index: {}]
  %s3 = inlined_call_operand.hbm [shape: f32[8,32], index: 3, kind: output, shape index: {}]
  %s4 = sld [smem:[#allocation0]]
  $region22: #{mem_decoder_attn.1} parent=0
    _
  %s6 = ssub.s32 1, %s4
  %s7 = scalar_select 0, %s6, %s4
  $region1: #{mem_decoder_attn.1} parent=0
    #allocation2 [shape = 'u8[4096]{0}', space=vmem, size = 0x1000, scoped, tag = 'output window, operand 0, single buffered']
    #allocation3 [shape = 's32[1]{0}', space=sflag, size = 0x4, scoped, tag = 'scoped memory for mem_decoder_attn.1']
    %8 = vsyncpa [#allocation3], 0
    // Predicated region
    $region2: #{mem_decoder_attn.1} parent=1 // pred_check
      _
    $region3: #{mem_decoder_attn.1} parent=1 // pred_check_branch
      %10 = sbr.rel (0) target = $region5
    $region4: #{mem_decoder_attn.1} parent=1 // pred_region
      _
    $region5: #{mem_decoder_attn.1} parent=1 // pred_fallthru
      _
    // Predicated region
    $region6: #{mem_decoder_attn.1} parent=1 // pred_check
      _
    $region7: #{mem_decoder_attn.1} parent=1 // pred_check_branch
      %12 = sbr.rel (0) target = $region9
    $region8: #{mem_decoder_attn.1} parent=1 // pred_region
      _
    $region9: #{mem_decoder_attn.1} parent=1 // pred_fallthru
      _
    // Predicated region
    $region10: #{mem_decoder_attn.1} parent=1 // pred_check
      _
    $region11: #{mem_decoder_attn.1} parent=1 // pred_check_branch
      %14 = sbr.rel (0) target = $region13
    $region12: #{mem_decoder_attn.1} parent=1 // pred_region
      _
    $region13: #{mem_decoder_attn.1} parent=1 // pred_fallthru
      _
    %v15 = vld [vmem:[%s0] sm:$0xff]
    %v16 = vld [vmem:[%s1] sm:$0xff]
    %v17 = vld [vmem:[%s1 + $0x8] sm:$0xff]
    %v18 = vld [vmem:[%s2] sm:$0xff]
    %v19 = vld [vmem:[%s2 + $0x8] sm:$0xff]
    %v20 = vld [vmem:[%s2 + $0x10] sm:$0xff]
    %v21 = vld [vmem:[%s2 + $0x18] sm:$0xff]
    %v22 = vld [vmem:[%s2 + $0x20] sm:$0xff]
    %v23 = vld [vmem:[%s2 + $0x28] sm:$0xff]
    %v24 = vld [vmem:[%s2 + $0x30] sm:$0xff]
    %v25 = vld [vmem:[%s2 + $0x38] sm:$0xff]
    %v26 = vld [vmem:[%s2 + $0x40] sm:$0xff]
    %v27 = vld [vmem:[%s2 + $0x48] sm:$0xff]
    %v28 = vld [vmem:[%s2 + $0x50] sm:$0xff]
    %v29 = vld [vmem:[%s2 + $0x58] sm:$0xff]
    %v30 = vld [vmem:[%s2 + $0x60] sm:$0xff]
    %v31 = vld [vmem:[%s2 + $0x68] sm:$0xff]
    %v32 = vld [vmem:[%s2 + $0x70] sm:$0xff]
    %v33 = vld [vmem:[%s2 + $0x78] sm:$0xff]
    %v34 = vld [vmem:[%s2 + $0x80] sm:$0x1]
    %v35 = vld [vmem:[%s2 + $0x88] sm:$0x1]
    %v36 = vlaneseq
    %v37 = vshrl.u32 %v36, 7
    %v38 = vsub.s32 0, %v37
    %v39 = vrot.slane %v34, %v38
    %vm40 = vcmask 523264
    %v42 = vsel %vm40, %v15, 0
    %44 = vmatprep.subr.mxu0 0.0
    %45 = vmatpush1.msra.mxu0 0.0
    %46 = vmatprep.subr.mxu0 0.0
    %47 = vmatpush1.msra.mxu0 0.0
    %48 = vmatprep.subr.mxu0 0.0
    %49 = vmatpush1.msra.mxu0 0.0
    %50 = vmatprep.subr.mxu0 0.0
    %51 = vmatpush1.msra.mxu0 0.0
    %52 = vmatprep.subr.mxu0 0.0
    %53 = vmatpush1.msra.mxu0 0.0
    %54 = vmatprep.subr.mxu0 0.0
    %55 = vmatpush1.msra.mxu0 0.0
    %56 = vmatprep.subr.mxu0 0.0
    %57 = vmatpush1.msra.mxu0 0.0
    %58 = vmatprep.subr.mxu0 0.0
    %59 = vmatpush1.msra.mxu0 0.0
    %60 = vmatprep.subr.mxu0 0.0
    %61 = vmatpush1.msra.mxu0 %v25
    %62 = vmatprep.subr.mxu0 0.0
    %63 = vmatpush1.msra.mxu0 %v24
    %64 = vmatprep.subr.mxu0 0.0
    %65 = vmatpush1.msra.mxu0 %v23
    %66 = vmatprep.subr.mxu0 0.0
    %67 = vmatpush1.msra.mxu0 %v22
    %68 = vmatprep.subr.mxu0 0.0
    %69 = vmatpush1.msra.mxu0 %v21
    %70 = vmatprep.subr.mxu0 0.0
    %71 = vmatpush1.msra.mxu0 %v20
    %72 = vmatprep.subr.mxu0 0.0
    %73 = vmatpush1.msra.mxu0 %v19
    %74 = vmatprep.subr.mxu0 0.0
    %75 = vmatpush1.msra.mxu0 %v18
    %76 = vmatprep.subr.mxu0 0.0
    %77 = vmatpush2.msra.mxu0 0.0
    %78 = vmatprep.subr.mxu0 0.0
    %79 = vmatpush2.msra.mxu0 0.0
    %80 = vmatprep.subr.mxu0 0.0
    %81 = vmatpush2.msra.mxu0 0.0
    %82 = vmatprep.subr.mxu0 0.0
    %83 = vmatpush2.msra.mxu0 0.0
    %84 = vmatprep.subr.mxu0 0.0
    %85 = vmatpush2.msra.mxu0 0.0
    %86 = vmatprep.subr.mxu0 0.0
    %87 = vmatpush2.msra.mxu0 0.0
    %88 = vmatprep.subr.mxu0 0.0
    %89 = vmatpush2.msra.mxu0 0.0
    %90 = vmatprep.subr.mxu0 0.0
    %91 = vmatpush2.msra.mxu0 0.0
    %92 = vmatprep.subr.mxu0 0.0
    %93 = vmatpush2.msra.mxu0 0.0
    %94 = vmatprep.subr.mxu0 0.0
    %95 = vmatpush2.msra.mxu0 0.0
    %96 = vmatprep.subr.mxu0 0.0
    %97 = vmatpush2.msra.mxu0 0.0
    %98 = vmatprep.subr.mxu0 0.0
    %99 = vmatpush2.msra.mxu0 0.0
    %100 = vmatprep.subr.mxu0 0.0
    %101 = vmatpush2.msra.mxu0 0.0
    %102 = vmatprep.subr.mxu0 0.0
    %103 = vmatpush2.msra.mxu0 0.0
    %104 = vmatprep.subr.mxu0 0.0
    %105 = vmatpush2.msra.mxu0 0.0
    %106 = vmatprep.subr.mxu0 0.0
    %107 = vmatpush2.msra.mxu0 0.0
    %108 = vmatprep.mubr.f32.mxu0 0.0
    %109 = vmatmul.mubr.f32.gmra.mxu0 %v42
    %v110 = vpop.f32.mrf.mxu0
    %v111 = vadd.f32 %v39, %v110
    %v112 = vpop.f32.mrf.mxu0
    %113 = vdwg.mxu0
    %vm114 = vcmask 261120
    %v116 = vsel %vm114, %v111, 0
    %v119 = vsel %vm114, %v16, 0
    %v122 = vsel %vm114, %v17, 0
    %124 = vmatprep.subr.mxu0 0.0
    %125 = vmatpush1.xpose.msra.mxu0 0.0
    %126 = vmatprep.subr.mxu0 0.0
    %127 = vmatpush1.xpose.msra.mxu0 0.0
    %128 = vmatprep.subr.mxu0 0.0
    %129 = vmatpush1.xpose.msra.mxu0 0.0
    %130 = vmatprep.subr.mxu0 0.0
    %131 = vmatpush1.xpose.msra.mxu0 0.0
    %132 = vmatprep.subr.mxu0 0.0
    %133 = vmatpush1.xpose.msra.mxu0 0.0
    %134 = vmatprep.subr.mxu0 0.0
    %135 = vmatpush1.xpose.msra.mxu0 0.0
    %136 = vmatprep.subr.mxu0 0.0
    %137 = vmatpush1.xpose.msra.mxu0 0.0
    %138 = vmatprep.subr.mxu0 0.0
    %139 = vmatpush1.xpose.msra.mxu0 0.0
    %140 = vmatprep.subr.mxu0 0.0
    %141 = vmatpush1.xpose.msra.mxu0 0.0
    %142 = vmatprep.subr.mxu0 0.0
    %143 = vmatpush1.xpose.msra.mxu0 0.0
    %144 = vmatprep.subr.mxu0 0.0
    %145 = vmatpush1.xpose.msra.mxu0 0.0
    %146 = vmatprep.subr.mxu0 0.0
    %147 = vmatpush1.xpose.msra.mxu0 0.0
    %148 = vmatprep.subr.mxu0 0.0
    %149 = vmatpush1.xpose.msra.mxu0 0.0
    %150 = vmatprep.subr.mxu0 0.0
    %151 = vmatpush1.xpose.msra.mxu0 0.0
    %152 = vmatprep.subr.mxu0 0.0
    %153 = vmatpush1.xpose.msra.mxu0 %v122
    %154 = vmatprep.subr.mxu0 0.0
    %155 = vmatpush1.xpose.msra.mxu0 %v119
    %156 = vmatprep.subr.mxu0 0.0
    %157 = vmatpush2.xpose.msra.mxu0 0.0
    %158 = vmatprep.subr.mxu0 0.0
    %159 = vmatpush2.xpose.msra.mxu0 0.0
    %160 = vmatprep.subr.mxu0 0.0
    %161 = vmatpush2.xpose.msra.mxu0 0.0
    %162 = vmatprep.subr.mxu0 0.0
    %163 = vmatpush2.xpose.msra.mxu0 0.0
    %164 = vmatprep.subr.mxu0 0.0
    %165 = vmatpush2.xpose.msra.mxu0 0.0
    %166 = vmatprep.subr.mxu0 0.0
    %167 = vmatpush2.xpose.msra.mxu0 0.0
    %168 = vmatprep.subr.mxu0 0.0
    %169 = vmatpush2.xpose.msra.mxu0 0.0
    %170 = vmatprep.subr.mxu0 0.0
    %171 = vmatpush2.xpose.msra.mxu0 0.0
    %172 = vmatprep.subr.mxu0 0.0
    %173 = vmatpush2.xpose.msra.mxu0 0.0
    %174 = vmatprep.subr.mxu0 0.0
    %175 = vmatpush2.xpose.msra.mxu0 0.0
    %176 = vmatprep.subr.mxu0 0.0
    %177 = vmatpush2.xpose.msra.mxu0 0.0
    %178 = vmatprep.subr.mxu0 0.0
    %179 = vmatpush2.xpose.msra.mxu0 0.0
    %180 = vmatprep.subr.mxu0 0.0
    %181 = vmatpush2.xpose.msra.mxu0 0.0
    %182 = vmatprep.subr.mxu0 0.0
    %183 = vmatpush2.xpose.msra.mxu0 0.0
    %184 = vmatprep.subr.mxu0 0.0
    %185 = vmatpush2.xpose.msra.mxu0 0.0
    %186 = vmatprep.subr.mxu0 0.0
    %187 = vmatpush2.xpose.msra.mxu0 0.0
    %188 = vmatprep.mubr.f32.mxu0 0.0
    %189 = vmatmul.mubr.f32.gmra.mxu0 %v116
    %v190 = vpop.f32.mrf.mxu0
    %v191 = vadd.f32 0.0, %v190
    %v192 = vpop.f32.mrf.mxu0
    %193 = vdwg.mxu0
    %vm194 = vcmask 130048
    %v195 = vsel %vm194, %v191, -inf
    %196 = vmax.xlane.f32.xlu0 %v195
    %v197 = vpop.xlane.xlu0 %196
    %v198 = vsub.f32 %v191, %v197
    %v199 = vmul.f32 %v198, 1.442695
    %v200 = vpow.pop %v199
    %v201 = vsel %vm194, %v200, 0.0
    %202 = vadd.xlane.f32.xlu0 %v201
    %v203 = vpop.xlane.xlu0 %202
    %v204 = vrcp.pop %v203
    %v205 = vmul.f32 %v200, %v204
    %v207 = vsel %vm194, %v205, 0
    %209 = vmatprep.subr.mxu0 0.0
    %210 = vmatpush1.msra.mxu0 0.0
    %211 = vmatprep.subr.mxu0 0.0
    %212 = vmatpush1.msra.mxu0 0.0
    %213 = vmatprep.subr.mxu0 0.0
    %214 = vmatpush1.msra.mxu0 0.0
    %215 = vmatprep.subr.mxu0 0.0
    %216 = vmatpush1.msra.mxu0 0.0
    %217 = vmatprep.subr.mxu0 0.0
    %218 = vmatpush1.msra.mxu0 0.0
    %219 = vmatprep.subr.mxu0 0.0
    %220 = vmatpush1.msra.mxu0 0.0
    %221 = vmatprep.subr.mxu0 0.0
    %222 = vmatpush1.msra.mxu0 0.0
    %223 = vmatprep.subr.mxu0 0.0
    %224 = vmatpush1.msra.mxu0 0.0
    %225 = vmatprep.subr.mxu0 0.0
    %226 = vmatpush1.msra.mxu0 0.0
    %227 = vmatprep.subr.mxu0 0.0
    %228 = vmatpush1.msra.mxu0 0.0
    %229 = vmatprep.subr.mxu0 0.0
    %230 = vmatpush1.msra.mxu0 0.0
    %231 = vmatprep.subr.mxu0 0.0
    %232 = vmatpush1.msra.mxu0 0.0
    %233 = vmatprep.subr.mxu0 0.0
    %234 = vmatpush1.msra.mxu0 0.0
    %235 = vmatprep.subr.mxu0 0.0
    %236 = vmatpush1.msra.mxu0 0.0
    %237 = vmatprep.subr.mxu0 0.0
    %238 = vmatpush1.msra.mxu0 %v17
    %239 = vmatprep.subr.mxu0 0.0
    %240 = vmatpush1.msra.mxu0 %v16
    %241 = vmatprep.subr.mxu0 0.0
    %242 = vmatpush2.msra.mxu0 0.0
    %243 = vmatprep.subr.mxu0 0.0
    %244 = vmatpush2.msra.mxu0 0.0
    %245 = vmatprep.subr.mxu0 0.0
    %246 = vmatpush2.msra.mxu0 0.0
    %247 = vmatprep.subr.mxu0 0.0
    %248 = vmatpush2.msra.mxu0 0.0
    %249 = vmatprep.subr.mxu0 0.0
    %250 = vmatpush2.msra.mxu0 0.0
    %251 = vmatprep.subr.mxu0 0.0
    %252 = vmatpush2.msra.mxu0 0.0
    %253 = vmatprep.subr.mxu0 0.0
    %254 = vmatpush2.msra.mxu0 0.0
    %255 = vmatprep.subr.mxu0 0.0
    %256 = vmatpush2.msra.mxu0 0.0
    %257 = vmatprep.subr.mxu0 0.0
    %258 = vmatpush2.msra.mxu0 0.0
    %259 = vmatprep.subr.mxu0 0.0
    %260 = vmatpush2.msra.mxu0 0.0
    %261 = vmatprep.subr.mxu0 0.0
    %262 = vmatpush2.msra.mxu0 0.0
    %263 = vmatprep.subr.mxu0 0.0
    %264 = vmatpush2.msra.mxu0 0.0
    %265 = vmatprep.subr.mxu0 0.0
    %266 = vmatpush2.msra.mxu0 0.0
    %267 = vmatprep.subr.mxu0 0.0
    %268 = vmatpush2.msra.mxu0 0.0
    %269 = vmatprep.subr.mxu0 0.0
    %270 = vmatpush2.msra.mxu0 0.0
    %271 = vmatprep.subr.mxu0 0.0
    %272 = vmatpush2.msra.mxu0 0.0
    %273 = vmatprep.mubr.f32.mxu0 0.0
    %274 = vmatmul.mubr.f32.gmra.mxu0 %v207
    %v275 = vpop.f32.mrf.mxu0
    %v276 = vadd.f32 0.0, %v275
    %v277 = vpop.f32.mrf.mxu0
    %278 = vdwg.mxu0
    %v280 = vsel %vm114, %v276, 0
    %282 = vmatprep.subr.mxu0 0.0
    %283 = vmatpush1.msra.mxu0 0.0
    %284 = vmatprep.subr.mxu0 0.0
    %285 = vmatpush1.msra.mxu0 0.0
    %286 = vmatprep.subr.mxu0 0.0
    %287 = vmatpush1.msra.mxu0 0.0
    %288 = vmatprep.subr.mxu0 0.0
    %289 = vmatpush1.msra.mxu0 0.0
    %290 = vmatprep.subr.mxu0 0.0
    %291 = vmatpush1.msra.mxu0 0.0
    %292 = vmatprep.subr.mxu0 0.0
    %293 = vmatpush1.msra.mxu0 0.0
    %294 = vmatprep.subr.mxu0 0.0
    %295 = vmatpush1.msra.mxu0 0.0
    %296 = vmatprep.subr.mxu0 0.0
    %297 = vmatpush1.msra.mxu0 0.0
    %298 = vmatprep.subr.mxu0 0.0
    %299 = vmatpush1.msra.mxu0 0.0
    %300 = vmatprep.subr.mxu0 0.0
    %301 = vmatpush1.msra.mxu0 0.0
    %302 = vmatprep.subr.mxu0 0.0
    %303 = vmatpush1.msra.mxu0 0.0
    %304 = vmatprep.subr.mxu0 0.0
    %305 = vmatpush1.msra.mxu0 0.0
    %306 = vmatprep.subr.mxu0 0.0
    %307 = vmatpush1.msra.mxu0 %v33
    %308 = vmatprep.subr.mxu0 0.0
    %309 = vmatpush1.msra.mxu0 %v32
    %310 = vmatprep.subr.mxu0 0.0
    %311 = vmatpush1.msra.mxu0 %v31
    %312 = vmatprep.subr.mxu0 0.0
    %313 = vmatpush1.msra.mxu0 %v30
    %314 = vmatprep.subr.mxu0 0.0
    %315 = vmatpush2.msra.mxu0 0.0
    %316 = vmatprep.subr.mxu0 0.0
    %317 = vmatpush2.msra.mxu0 0.0
    %318 = vmatprep.subr.mxu0 0.0
    %319 = vmatpush2.msra.mxu0 0.0
    %320 = vmatprep.subr.mxu0 0.0
    %321 = vmatpush2.msra.mxu0 0.0
    %322 = vmatprep.subr.mxu0 0.0
    %323 = vmatpush2.msra.mxu0 0.0
    %324 = vmatprep.subr.mxu0 0.0
    %325 = vmatpush2.msra.mxu0 0.0
    %326 = vmatprep.subr.mxu0 0.0
    %327 = vmatpush2.msra.mxu0 0.0
    %328 = vmatprep.subr.mxu0 0.0
    %329 = vmatpush2.msra.mxu0 0.0
    %330 = vmatprep.subr.mxu0 0.0
    %331 = vmatpush2.msra.mxu0 0.0
    %332 = vmatprep.subr.mxu0 0.0
    %333 = vmatpush2.msra.mxu0 0.0
    %334 = vmatprep.subr.mxu0 0.0
    %335 = vmatpush2.msra.mxu0 0.0
    %336 = vmatprep.subr.mxu0 0.0
    %337 = vmatpush2.msra.mxu0 0.0
    %338 = vmatprep.subr.mxu0 0.0
    %339 = vmatpush2.msra.mxu0 0.0
    %340 = vmatprep.subr.mxu0 0.0
    %341 = vmatpush2.msra.mxu0 0.0
    %342 = vmatprep.subr.mxu0 0.0
    %343 = vmatpush2.msra.mxu0 0.0
    %344 = vmatprep.subr.mxu0 0.0
    %345 = vmatpush2.msra.mxu0 0.0
    %346 = vmatprep.mubr.f32.mxu0 0.0
    %347 = vmatmul.mubr.f32.gmra.mxu0 %v280
    %v348 = vpop.f32.mrf.mxu0
    %v349 = vadd.f32 0.0, %v348
    %v350 = vpop.f32.mrf.mxu0
    %351 = vdwg.mxu0
    %352 = vmatprep.subr.mxu0 0.0
    %353 = vmatpush1.msra.mxu0 0.0
    %354 = vmatprep.subr.mxu0 0.0
    %355 = vmatpush1.msra.mxu0 0.0
    %356 = vmatprep.subr.mxu0 0.0
    %357 = vmatpush1.msra.mxu0 0.0
    %358 = vmatprep.subr.mxu0 0.0
    %359 = vmatpush1.msra.mxu0 0.0
    %360 = vmatprep.subr.mxu0 0.0
    %361 = vmatpush1.msra.mxu0 0.0
    %362 = vmatprep.subr.mxu0 0.0
    %363 = vmatpush1.msra.mxu0 0.0
    %364 = vmatprep.subr.mxu0 0.0
    %365 = vmatpush1.msra.mxu0 0.0
    %366 = vmatprep.subr.mxu0 0.0
    %367 = vmatpush1.msra.mxu0 0.0
    %368 = vmatprep.subr.mxu0 0.0
    %369 = vmatpush1.msra.mxu0 0.0
    %370 = vmatprep.subr.mxu0 0.0
    %371 = vmatpush1.msra.mxu0 0.0
    %372 = vmatprep.subr.mxu0 0.0
    %373 = vmatpush1.msra.mxu0 0.0
    %374 = vmatprep.subr.mxu0 0.0
    %375 = vmatpush1.msra.mxu0 0.0
    %376 = vmatprep.subr.mxu0 0.0
    %377 = vmatpush1.msra.mxu0 %v29
    %378 = vmatprep.subr.mxu0 0.0
    %379 = vmatpush1.msra.mxu0 %v28
    %380 = vmatprep.subr.mxu0 0.0
    %381 = vmatpush1.msra.mxu0 %v27
    %382 = vmatprep.subr.mxu0 0.0
    %383 = vmatpush1.msra.mxu0 %v26
    %384 = vmatprep.subr.mxu0 0.0
    %385 = vmatpush2.msra.mxu0 0.0
    %386 = vmatprep.subr.mxu0 0.0
    %387 = vmatpush2.msra.mxu0 0.0
    %388 = vmatprep.subr.mxu0 0.0
    %389 = vmatpush2.msra.mxu0 0.0
    %390 = vmatprep.subr.mxu0 0.0
    %391 = vmatpush2.msra.mxu0 0.0
    %392 = vmatprep.subr.mxu0 0.0
    %393 = vmatpush2.msra.mxu0 0.0
    %394 = vmatprep.subr.mxu0 0.0
    %395 = vmatpush2.msra.mxu0 0.0
    %396 = vmatprep.subr.mxu0 0.0
    %397 = vmatpush2.msra.mxu0 0.0
    %398 = vmatprep.subr.mxu0 0.0
    %399 = vmatpush2.msra.mxu0 0.0
    %400 = vmatprep.subr.mxu0 0.0
    %401 = vmatpush2.msra.mxu0 0.0
    %402 = vmatprep.subr.mxu0 0.0
    %403 = vmatpush2.msra.mxu0 0.0
    %404 = vmatprep.subr.mxu0 0.0
    %405 = vmatpush2.msra.mxu0 0.0
    %406 = vmatprep.subr.mxu0 0.0
    %407 = vmatpush2.msra.mxu0 0.0
    %408 = vmatprep.subr.mxu0 0.0
    %409 = vmatpush2.msra.mxu0 0.0
    %410 = vmatprep.subr.mxu0 0.0
    %411 = vmatpush2.msra.mxu0 0.0
    %412 = vmatprep.subr.mxu0 0.0
    %413 = vmatpush2.msra.mxu0 0.0
    %414 = vmatprep.subr.mxu0 0.0
    %415 = vmatpush2.msra.mxu0 0.0
    %416 = vmatprep.mubr.f32.mxu0 0.0
    %417 = vmatmul.mubr.f32.gmra.mxu0 %v116
    %v418 = vpop.f32.mrf.mxu0
    %v419 = vadd.f32 %v349, %v418
    %v420 = vpop.f32.mrf.mxu0
    %421 = vdwg.mxu0
    %v422 = vlaneseq
    %v423 = vshrl.u32 %v422, 7
    %v424 = vsub.s32 0, %v423
    %v425 = vrot.slane %v35, %v424
    %v426 = vadd.f32 %v419, %v425
    %v427 = vtanh.pop %v426
    %v429 = vsel %vm114, %v427, 0
    %431 = vmatprep.subr.mxu0 0.0
    %432 = vmatpush1.xpose.msra.mxu0 0.0
    %433 = vmatprep.subr.mxu0 0.0
    %434 = vmatpush1.xpose.msra.mxu0 0.0
    %435 = vmatprep.subr.mxu0 0.0
    %436 = vmatpush1.xpose.msra.mxu0 0.0
    %437 = vmatprep.subr.mxu0 0.0
    %438 = vmatpush1.xpose.msra.mxu0 0.0
    %439 = vmatprep.subr.mxu0 0.0
    %440 = vmatpush1.xpose.msra.mxu0 0.0
    %441 = vmatprep.subr.mxu0 0.0
    %442 = vmatpush1.xpose.msra.mxu0 0.0
    %443 = vmatprep.subr.mxu0 0.0
    %444 = vmatpush1.xpose.msra.mxu0 0.0
    %445 = vmatprep.subr.mxu0 0.0
    %446 = vmatpush1.xpose.msra.mxu0 0.0
    %447 = vmatprep.subr.mxu0 0.0
    %448 = vmatpush1.xpose.msra.mxu0 0.0
    %449 = vmatprep.subr.mxu0 0.0
    %450 = vmatpush1.xpose.msra.mxu0 0.0
    %451 = vmatprep.subr.mxu0 0.0
    %452 = vmatpush1.xpose.msra.mxu0 0.0
    %453 = vmatprep.subr.mxu0 0.0
    %454 = vmatpush1.xpose.msra.mxu0 0.0
    %455 = vmatprep.subr.mxu0 0.0
    %456 = vmatpush1.xpose.msra.mxu0 0.0
    %457 = vmatprep.subr.mxu0 0.0
    %458 = vmatpush1.xpose.msra.mxu0 0.0
    %459 = vmatprep.subr.mxu0 0.0
    %460 = vmatpush1.xpose.msra.mxu0 %v122
    %461 = vmatprep.subr.mxu0 0.0
    %462 = vmatpush1.xpose.msra.mxu0 %v119
    %463 = vmatprep.subr.mxu0 0.0
    %464 = vmatpush2.xpose.msra.mxu0 0.0
    %465 = vmatprep.subr.mxu0 0.0
    %466 = vmatpush2.xpose.msra.mxu0 0.0
    %467 = vmatprep.subr.mxu0 0.0
    %468 = vmatpush2.xpose.msra.mxu0 0.0
    %469 = vmatprep.subr.mxu0 0.0
    %470 = vmatpush2.xpose.msra.mxu0 0.0
    %471 = vmatprep.subr.mxu0 0.0
    %472 = vmatpush2.xpose.msra.mxu0 0.0
    %473 = vmatprep.subr.mxu0 0.0
    %474 = vmatpush2.xpose.msra.mxu0 0.0
    %475 = vmatprep.subr.mxu0 0.0
    %476 = vmatpush2.xpose.msra.mxu0 0.0
    %477 = vmatprep.subr.mxu0 0.0
    %478 = vmatpush2.xpose.msra.mxu0 0.0
    %479 = vmatprep.subr.mxu0 0.0
    %480 = vmatpush2.xpose.msra.mxu0 0.0
    %481 = vmatprep.subr.mxu0 0.0
    %482 = vmatpush2.xpose.msra.mxu0 0.0
    %483 = vmatprep.subr.mxu0 0.0
    %484 = vmatpush2.xpose.msra.mxu0 0.0
    %485 = vmatprep.subr.mxu0 0.0
    %486 = vmatpush2.xpose.msra.mxu0 0.0
    %487 = vmatprep.subr.mxu0 0.0
    %488 = vmatpush2.xpose.msra.mxu0 0.0
    %489 = vmatprep.subr.mxu0 0.0
    %490 = vmatpush2.xpose.msra.mxu0 0.0
    %491 = vmatprep.subr.mxu0 0.0
    %492 = vmatpush2.xpose.msra.mxu0 0.0
    %493 = vmatprep.subr.mxu0 0.0
    %494 = vmatpush2.xpose.msra.mxu0 0.0
    %495 = vmatprep.mubr.f32.mxu0 0.0
    %496 = vmatmul.mubr.f32.gmra.mxu0 %v429
    %v497 = vpop.f32.mrf.mxu0
    %v498 = vadd.f32 0.0, %v497
    %v499 = vpop.f32.mrf.mxu0
    %500 = vdwg.mxu0
    %v501 = vsel %vm194, %v498, -inf
    %502 = vmax.xlane.f32.xlu0 %v501
    %v503 = vpop.xlane.xlu0 %502
    %v504 = vsub.f32 %v498, %v503
    %v505 = vmul.f32 %v504, 1.442695
    %v506 = vpow.pop %v505
    %v507 = vsel %vm194, %v506, 0.0
    %508 = vadd.xlane.f32.xlu0 %v507
    %v509 = vpop.xlane.xlu0 %508
    %v510 = vrcp.pop %v509
    %v511 = vmul.f32 %v506, %v510
    %v513 = vsel %vm194, %v511, 0
    %515 = vmatprep.subr.mxu0 0.0
    %516 = vmatpush1.msra.mxu0 0.0
    %517 = vmatprep.subr.mxu0 0.0
    %518 = vmatpush1.msra.mxu0 0.0
    %519 = vmatprep.subr.mxu0 0.0
    %520 = vmatpush1.msra.mxu0 0.0
    %521 = vmatprep.subr.mxu0 0.0
    %522 = vmatpush1.msra.mxu0 0.0
    %523 = vmatprep.subr.mxu0 0.0
    %524 = vmatpush1.msra.mxu0 0.0
    %525 = vmatprep.subr.mxu0 0.0
    %526 = vmatpush1.msra.mxu0 0.0
    %527 = vmatprep.subr.mxu0 0.0
    %528 = vmatpush1.msra.mxu0 0.0
    %529 = vmatprep.subr.mxu0 0.0
    %530 = vmatpush1.msra.mxu0 0.0
    %531 = vmatprep.subr.mxu0 0.0
    %532 = vmatpush1.msra.mxu0 0.0
    %533 = vmatprep.subr.mxu0 0.0
    %534 = vmatpush1.msra.mxu0 0.0
    %535 = vmatprep.subr.mxu0 0.0
    %536 = vmatpush1.msra.mxu0 0.0
    %537 = vmatprep.subr.mxu0 0.0
    %538 = vmatpush1.msra.mxu0 0.0
    %539 = vmatprep.subr.mxu0 0.0
    %540 = vmatpush1.msra.mxu0 0.0
    %541 = vmatprep.subr.mxu0 0.0
    %542 = vmatpush1.msra.mxu0 0.0
    %543 = vmatprep.subr.mxu0 0.0
    %544 = vmatpush1.msra.mxu0 %v17
    %545 = vmatprep.subr.mxu0 0.0
    %546 = vmatpush1.msra.mxu0 %v16
    %547 = vmatprep.subr.mxu0 0.0
    %548 = vmatpush2.msra.mxu0 0.0
    %549 = vmatprep.subr.mxu0 0.0
    %550 = vmatpush2.msra.mxu0 0.0
    %551 = vmatprep.subr.mxu0 0.0
    %552 = vmatpush2.msra.mxu0 0.0
    %553 = vmatprep.subr.mxu0 0.0
    %554 = vmatpush2.msra.mxu0 0.0
    %555 = vmatprep.subr.mxu0 0.0
    %556 = vmatpush2.msra.mxu0 0.0
    %557 = vmatprep.subr.mxu0 0.0
    %558 = vmatpush2.msra.mxu0 0.0
    %559 = vmatprep.subr.mxu0 0.0
    %560 = vmatpush2.msra.mxu0 0.0
    %561 = vmatprep.subr.mxu0 0.0
    %562 = vmatpush2.msra.mxu0 0.0
    %563 = vmatprep.subr.mxu0 0.0
    %564 = vmatpush2.msra.mxu0 0.0
    %565 = vmatprep.subr.mxu0 0.0
    %566 = vmatpush2.msra.mxu0 0.0
    %567 = vmatprep.subr.mxu0 0.0
    %568 = vmatpush2.msra.mxu0 0.0
    %569 = vmatprep.subr.mxu0 0.0
    %570 = vmatpush2.msra.mxu0 0.0
    %571 = vmatprep.subr.mxu0 0.0
    %572 = vmatpush2.msra.mxu0 0.0
    %573 = vmatprep.subr.mxu0 0.0
    %574 = vmatpush2.msra.mxu0 0.0
    %575 = vmatprep.subr.mxu0 0.0
    %576 = vmatpush2.msra.mxu0 0.0
    %577 = vmatprep.subr.mxu0 0.0
    %578 = vmatpush2.msra.mxu0 0.0
    %579 = vmatprep.mubr.f32.mxu0 0.0
    %580 = vmatmul.mubr.f32.gmra.mxu0 %v513
    %v581 = vpop.f32.mrf.mxu0
    %v582 = vadd.f32 0.0, %v581
    %v583 = vpop.f32.mrf.mxu0
    %584 = vdwg.mxu0
    %v586 = vsel %vm114, %v582, 0
    %588 = vmatprep.subr.mxu0 0.0
    %589 = vmatpush1.msra.mxu0 0.0
    %590 = vmatprep.subr.mxu0 0.0
    %591 = vmatpush1.msra.mxu0 0.0
    %592 = vmatprep.subr.mxu0 0.0
    %593 = vmatpush1.msra.mxu0 0.0
    %594 = vmatprep.subr.mxu0 0.0
    %595 = vmatpush1.msra.mxu0 0.0
    %596 = vmatprep.subr.mxu0 0.0
    %597 = vmatpush1.msra.mxu0 0.0
    %598 = vmatprep.subr.mxu0 0.0
    %599 = vmatpush1.msra.mxu0 0.0
    %600 = vmatprep.subr.mxu0 0.0
    %601 = vmatpush1.msra.mxu0 0.0
    %602 = vmatprep.subr.mxu0 0.0
    %603 = vmatpush1.msra.mxu0 0.0
    %604 = vmatprep.subr.mxu0 0.0
    %605 = vmatpush1.msra.mxu0 0.0
    %606 = vmatprep.subr.mxu0 0.0
    %607 = vmatpush1.msra.mxu0 0.0
    %608 = vmatprep.subr.mxu0 0.0
    %609 = vmatpush1.msra.mxu0 0.0
    %610 = vmatprep.subr.mxu0 0.0
    %611 = vmatpush1.msra.mxu0 0.0
    %612 = vmatprep.subr.mxu0 0.0
    %613 = vmatpush1.msra.mxu0 %v33
    %614 = vmatprep.subr.mxu0 0.0
    %615 = vmatpush1.msra.mxu0 %v32
    %616 = vmatprep.subr.mxu0 0.0
    %617 = vmatpush1.msra.mxu0 %v31
    %618 = vmatprep.subr.mxu0 0.0
    %619 = vmatpush1.msra.mxu0 %v30
    %620 = vmatprep.subr.mxu0 0.0
    %621 = vmatpush2.msra.mxu0 0.0
    %622 = vmatprep.subr.mxu0 0.0
    %623 = vmatpush2.msra.mxu0 0.0
    %624 = vmatprep.subr.mxu0 0.0
    %625 = vmatpush2.msra.mxu0 0.0
    %626 = vmatprep.subr.mxu0 0.0
    %627 = vmatpush2.msra.mxu0 0.0
    %628 = vmatprep.subr.mxu0 0.0
    %629 = vmatpush2.msra.mxu0 0.0
    %630 = vmatprep.subr.mxu0 0.0
    %631 = vmatpush2.msra.mxu0 0.0
    %632 = vmatprep.subr.mxu0 0.0
    %633 = vmatpush2.msra.mxu0 0.0
    %634 = vmatprep.subr.mxu0 0.0
    %635 = vmatpush2.msra.mxu0 0.0
    %636 = vmatprep.subr.mxu0 0.0
    %637 = vmatpush2.msra.mxu0 0.0
    %638 = vmatprep.subr.mxu0 0.0
    %639 = vmatpush2.msra.mxu0 0.0
    %640 = vmatprep.subr.mxu0 0.0
    %641 = vmatpush2.msra.mxu0 0.0
    %642 = vmatprep.subr.mxu0 0.0
    %643 = vmatpush2.msra.mxu0 0.0
    %644 = vmatprep.subr.mxu0 0.0
    %645 = vmatpush2.msra.mxu0 0.0
    %646 = vmatprep.subr.mxu0 0.0
    %647 = vmatpush2.msra.mxu0 0.0
    %648 = vmatprep.subr.mxu0 0.0
    %649 = vmatpush2.msra.mxu0 0.0
    %650 = vmatprep.subr.mxu0 0.0
    %651 = vmatpush2.msra.mxu0 0.0
    %652 = vmatprep.mubr.f32.mxu0 0.0
    %653 = vmatmul.mubr.f32.gmra.mxu0 %v586
    %v654 = vpop.f32.mrf.mxu0
    %v655 = vadd.f32 0.0, %v654
    %v656 = vpop.f32.mrf.mxu0
    %657 = vdwg.mxu0
    %658 = vmatprep.subr.mxu0 0.0
    %659 = vmatpush1.msra.mxu0 0.0
    %660 = vmatprep.subr.mxu0 0.0
    %661 = vmatpush1.msra.mxu0 0.0
    %662 = vmatprep.subr.mxu0 0.0
    %663 = vmatpush1.msra.mxu0 0.0
    %664 = vmatprep.subr.mxu0 0.0
    %665 = vmatpush1.msra.mxu0 0.0
    %666 = vmatprep.subr.mxu0 0.0
    %667 = vmatpush1.msra.mxu0 0.0
    %668 = vmatprep.subr.mxu0 0.0
    %669 = vmatpush1.msra.mxu0 0.0
    %670 = vmatprep.subr.mxu0 0.0
    %671 = vmatpush1.msra.mxu0 0.0
    %672 = vmatprep.subr.mxu0 0.0
    %673 = vmatpush1.msra.mxu0 0.0
    %674 = vmatprep.subr.mxu0 0.0
    %675 = vmatpush1.msra.mxu0 0.0
    %676 = vmatprep.subr.mxu0 0.0
    %677 = vmatpush1.msra.mxu0 0.0
    %678 = vmatprep.subr.mxu0 0.0
    %679 = vmatpush1.msra.mxu0 0.0
    %680 = vmatprep.subr.mxu0 0.0
    %681 = vmatpush1.msra.mxu0 0.0
    %682 = vmatprep.subr.mxu0 0.0
    %683 = vmatpush1.msra.mxu0 %v29
    %684 = vmatprep.subr.mxu0 0.0
    %685 = vmatpush1.msra.mxu0 %v28
    %686 = vmatprep.subr.mxu0 0.0
    %687 = vmatpush1.msra.mxu0 %v27
    %688 = vmatprep.subr.mxu0 0.0
    %689 = vmatpush1.msra.mxu0 %v26
    %690 = vmatprep.subr.mxu0 0.0
    %691 = vmatpush2.msra.mxu0 0.0
    %692 = vmatprep.subr.mxu0 0.0
    %693 = vmatpush2.msra.mxu0 0.0
    %694 = vmatprep.subr.mxu0 0.0
    %695 = vmatpush2.msra.mxu0 0.0
    %696 = vmatprep.subr.mxu0 0.0
    %697 = vmatpush2.msra.mxu0 0.0
    %698 = vmatprep.subr.mxu0 0.0
    %699 = vmatpush2.msra.mxu0 0.0
    %700 = vmatprep.subr.mxu0 0.0
    %701 = vmatpush2.msra.mxu0 0.0
    %702 = vmatprep.subr.mxu0 0.0
    %703 = vmatpush2.msra.mxu0 0.0
    %704 = vmatprep.subr.mxu0 0.0
    %705 = vmatpush2.msra.mxu0 0.0
    %706 = vmatprep.subr.mxu0 0.0
    %707 = vmatpush2.msra.mxu0 0.0
    %708 = vmatprep.subr.mxu0 0.0
    %709 = vmatpush2.msra.mxu0 0.0
    %710 = vmatprep.subr.mxu0 0.0
    %711 = vmatpush2.msra.mxu0 0.0
    %712 = vmatprep.subr.mxu0 0.0
    %713 = vmatpush2.msra.mxu0 0.0
    %714 = vmatprep.subr.mxu0 0.0
    %715 = vmatpush2.msra.mxu0 0.0
    %716 = vmatprep.subr.mxu0 0.0
    %717 = vmatpush2.msra.mxu0 0.0
    %718 = vmatprep.subr.mxu0 0.0
    %719 = vmatpush2.msra.mxu0 0.0
    %720 = vmatprep.subr.mxu0 0.0
    %721 = vmatpush2.msra.mxu0 0.0
    %722 = vmatprep.mubr.f32.mxu0 0.0
    %723 = vmatmul.mubr.f32.gmra.mxu0 %v429
    %v724 = vpop.f32.mrf.mxu0
    %v725 = vadd.f32 %v655, %v724
    %v726 = vpop.f32.mrf.mxu0
    %727 = vdwg.mxu0
    %v728 = vadd.f32 %v725, %v425
    %v729 = vtanh.pop %v728
    %730 = vst.msk [vmem:[#allocation2] sm:$0xff] %vm114, %v729
    // Predicated region
    $region14: #{mem_decoder_attn.1} parent=1 // pred_check
      _
    $region15: #{mem_decoder_attn.1} parent=1 // pred_check_branch
      %732 = sbr.rel (0) target = $region17
    $region16: #{mem_decoder_attn.1} parent=1 // pred_region
      %s734 = ssub.s32 128, 128
      %735 = vsyncadd [#allocation3], %s734
      %s737 = sshll.u32 [#allocation2], 4
      %s738 = int_to_ptr.vmem [resolvable:$true] %s737
      %740 = dma.vmem_to_hbm [thread:$0]  %s738, 128, %s3, [#allocation3]
    $region17: #{mem_decoder_attn.1} parent=1 // pred_fallthru
      _
    // Predicated region
    $region18: #{mem_decoder_attn.1} parent=1 // pred_check
      _
    $region19: #{mem_decoder_attn.1} parent=1 // pred_check_branch
      %742 = sbr.rel (0) target = $region21
    $region20: #{mem_decoder_attn.1} parent=1 // pred_region
      %743 = dma.done [#allocation3], 128
    $region21: #{mem_decoder_attn.1} parent=1 // pred_fallthru
      _
    %744 = vsyncpa [#allocation3], 1

</llo_original>
